<compile_context>
chip_gen: v6e
topology: v6e:2x2x1
jax: 0.10.0
libtpu: 0.0.40
codegen_flags: <defaults>
</compile_context>

<pallas_src>
import jax
import jax.numpy as jnp
import numpy as np
from jax.experimental import pallas as pl
from jax.experimental.pallas import tpu as pltpu

GN_EPS = 1e-5  # PyTorch nn.GroupNorm default eps


def _sa_kernel(xa_ref, xb_ref, pa_ref, pb_ref, o_ref):
    """One shuffled output slot per grid step.

    xa_ref / xb_ref : (bt, Ch, HW)  sources of the slot's even / odd channels
    pa_ref / pb_ref : (Ch, 3)       per-row folded constants [A, B, C]
    o_ref           : (bt, Ch, 2*HW)
    """
    hw = xa_ref.shape[-1]
    inv_hw = 1.0 / hw

    def gated(x_ref, p_ref):
        x = x_ref[...].astype(jnp.float32)           # (bt, Ch, HW)
        p = p_ref[...].astype(jnp.float32)           # (Ch, 3)
        A = p[:, 0:1][None]                          # (1, Ch, 1)
        B = p[:, 1:2][None]
        C = p[:, 2:3][None]
        # Single-pass moments over the spatial axis (f32).
        s1 = jnp.sum(x, axis=-1, keepdims=True)
        s2 = jnp.sum(x * x, axis=-1, keepdims=True)
        mean = s1 * inv_hw
        var = jnp.maximum(s2 * inv_hw - mean * mean, 0.0)
        inv_std = jax.lax.rsqrt(var + GN_EPS)
        # t = A*(x-mean)*inv_std + B*mean + C  ==  g1*x + g0  (2 full-size ops)
        g1 = A * inv_std
        g0 = (B - g1) * mean + C
        t = x * g1 + g0
        gate = 0.5 * jnp.tanh(0.5 * t) + 0.5         # sigmoid on the EUP
        return (x * gate).astype(o_ref.dtype)

    # Fused channel_shuffle(groups=2): even output channels land in lanes
    # [0, HW), odd ones in [HW, 2*HW); the wrapper's final reshape is free.
    o_ref[...] = jnp.concatenate(
        [gated(xa_ref, pa_ref), gated(xb_ref, pb_ref)], axis=-1)


def shuffle_attention_pallas(x, params, G, batch_block=None):
    """x: (b, c, h, w) NCHW. Returns the ShuffleAttention forward (incl. shuffle)."""
    b, c, h, w = x.shape
    assert c % (2 * G) == 0
    Ch = c // (2 * G)                 # channels per attention half
    HW = h * w
    dtype = x.dtype

    # ---- fold the six (Ch,1) parameters into one (2, Ch, 3) [A, B, C] table ----
    # half 0 (channel attn): t = cweight*mean + cbias                      -> A = 0
    # half 1 (spatial attn): t = (sw*gamma)*(x-mean)*inv_std + sw*beta+sb  -> B = 0
    cweight, cbias, sweight, sbias, gn_gamma, gn_beta = params
    flat = lambda p: jnp.reshape(p, (Ch,)).astype(jnp.float32)
    zero = jnp.zeros((Ch,), jnp.float32)
    P = jnp.stack([
        jnp.stack([zero, flat(cweight), flat(cbias)], axis=-1),
        jnp.stack([flat(sweight) * flat(gn_gamma), zero,
                   flat(sweight) * flat(gn_beta) + flat(sbias)], axis=-1),
    ], axis=0)                                                   # (2, Ch, 3)

    # Free reshape: half-index t = 2*g + h becomes a flat dim of size 2*G.
    x4 = x.reshape(b, 2 * G, Ch, HW)

    # ---- batch-tile / VMEM sizing (per-chip) ----
    itemsize = jnp.dtype(dtype).itemsize
    ch_pad = ((Ch + 7) // 8) * 8
    hw_pad = ((HW + 127) // 128) * 128
    ohw_pad = ((2 * HW + 127) // 128) * 128
    half_in_dt, half_in_f32 = ch_pad * hw_pad * itemsize, ch_pad * hw_pad * 4
    out_dt, out_f32 = ch_pad * ohw_pad * itemsize, ch_pad * ohw_pad * 4
    # double-buffered IO + ~3 f32 temporaries per half + 1 f32 output temp
    per_sample = 2 * (2 * half_in_dt + out_dt) + 6 * half_in_f32 + out_f32

    try:
        vmem_cap = int(pltpu.get_tpu_info().vmem_capacity_bytes)
    except Exception:
        vmem_cap = 64 << 20               # assume v7x per-TC capacity (smallest)
    budget = vmem_cap // 2                # ~32 MiB on v7x, ~64 MiB on v5e/v6e

    target_in = 6 << 20                   # total input bytes per step; sweep 4-8 MiB
    if batch_block is None:
        bt = min(b,
                 max(1, (budget * 3 // 4) // per_sample),
                 max(1, target_in // (2 * half_in_f32)))
    else:
        bt = max(1, min(int(batch_block), b))
    est = per_sample * bt + (256 << 10)
    vmem_limit = int(min(max(vmem_cap - (8 << 20), 16 << 20),
                         max(est + (4 << 20), 16 << 20)))
    # TODO(synk): a single sample with very large HW can overflow the budget;
    # that would need an HW-tiled two-pass (stats, then apply) structure.
    # TODO(synk): for Ch < 8 the (Ch, HW) slabs still pad to 8 sublanes; a
    # fully dense layout would require an HBM-side repack of the input.

    # Output slot a interleaves (on lanes) the gated halves t = a (even output
    # channels) and t = G + a (odd output channels).  The output block's
    # trailing dims always equal the full (Ch, 2*HW) dims -> any HW/Ch works.
    grid = (pl.cdiv(b, bt), G)
    out = pl.pallas_call(
        _sa_kernel,
        out_shape=jax.ShapeDtypeStruct((b, G, Ch, 2 * HW), dtype),
        grid_spec=pltpu.PrefetchScalarGridSpec(
            num_scalar_prefetch=0,
            grid=grid,
            in_specs=[
                pl.BlockSpec((bt, None, Ch, HW),
                             lambda bi, a: (bi, a, 0, 0)),
                pl.BlockSpec((bt, None, Ch, HW),
                             lambda bi, a: (bi, G + a, 0, 0)),
                pl.BlockSpec((None, Ch, 3),
                             lambda bi, a: (a % 2, 0, 0)),
                pl.BlockSpec((None, Ch, 3),
                             lambda bi, a: ((G + a) % 2, 0, 0)),
            ],
            out_specs=pl.BlockSpec((bt, None, Ch, 2 * HW),
                                   lambda bi, a: (bi, a, 0, 0)),
        ),
        compiler_params=pltpu.CompilerParams(
            dimension_semantics=("parallel", "parallel"),
            vmem_limit_bytes=vmem_limit),
    )(x4, x4, P, P)
    return out.reshape(b, c, h, w)


def shuffle_attention_ref(x, params, G):
    """Pure-JAX reference mirroring the PyTorch forward exactly."""
    cweight, cbias, sweight, sbias, gn_gamma, gn_beta = params
    b, c, h, w = x.shape
    Ch = c // (2 * G)
    xg = x.reshape(b * G, c // G, h, w)
    x0, x1 = xg[:, :Ch], xg[:, Ch:]

    # channel attention
    x_channel = jnp.mean(x0, axis=(2, 3), keepdims=True)
    x_channel = cweight[None, :, :, None] * x_channel + cbias[None, :, :, None]
    x_channel = x0 * jax.nn.sigmoid(x_channel)

    # spatial attention: GroupNorm with num_groups == num_channels == Ch
    mean = jnp.mean(x1, axis=(2, 3), keepdims=True)
    var = jnp.mean((x1 - mean) ** 2, axis=(2, 3), keepdims=True)
    gn = (x1 - mean) / jnp.sqrt(var + GN_EPS)
    gn = gn * gn_gamma[None, :, :, None] + gn_beta[None, :, :, None]
    x_spatial = sweight[None, :, :, None] * gn + sbias[None, :, :, None]
    x_spatial = x1 * jax.nn.sigmoid(x_spatial)

    out = jnp.concatenate([x_channel, x_spatial], axis=1)
    out = out.reshape(b, c, h, w)
    out = out.reshape(b, 2, c // 2, h, w).transpose(0, 2, 1, 3, 4)
    return out.reshape(b, c, h, w)


if __name__ == "__main__":
    def make_params(key, Ch):
        ks = jax.random.split(key, 6)
        cweight = 0.5 * jax.random.normal(ks[0], (Ch, 1), jnp.float32)
        cbias = 1.0 + 0.1 * jax.random.normal(ks[1], (Ch, 1), jnp.float32)
        sweight = 0.5 * jax.random.normal(ks[2], (Ch, 1), jnp.float32)
        sbias = 1.0 + 0.1 * jax.random.normal(ks[3], (Ch, 1), jnp.float32)
        gamma = 1.0 + 0.1 * jax.random.normal(ks[4], (Ch, 1), jnp.float32)
        beta = 0.1 * jax.random.normal(ks[5], (Ch, 1), jnp.float32)
        return (cweight, cbias, sweight, sbias, gamma, beta)

    fn = jax.jit(shuffle_attention_pallas, static_argnums=(2, 3))
    key = jax.random.PRNGKey(0)

    cases = [
        # (b, channel, h, w, G, batch_block)
        (2, 32, 16, 16, 4, None),   # HW=256 (lane aligned), Ch=4
        (2, 48, 12, 12, 3, None),   # HW=144 (not 128-aligned), odd G, Ch=8
        (3, 64, 10, 10, 8, 2),      # HW=100, ragged batch tile (cdiv(3,2)=2)
    ]
    for (b, channel, h, w, G, bb) in cases:
        key, kx, kp = jax.random.split(key, 3)
        x = jax.random.normal(kx, (b, channel, h, w), jnp.float32)
        params = make_params(kp, channel // (2 * G))
        out = jax.block_until_ready(fn(x, params, G, bb))
        ref = jax.block_until_ready(shuffle_attention_ref(x, params, G))
        # single-pass variance + EUP tanh-sigmoid vs. reference: a few ulps at f32
        np.testing.assert_allclose(np.asarray(out), np.asarray(ref),
                                   rtol=2e-5, atol=2e-5)

    print("KERNEL_OK")
</pallas_src>

<mosaic_0001>
module attributes {stable_mosaic.version = 11 : i64} {
  func.func @_sa_kernel(%arg0: i32, %arg1: i32, %arg2: memref<2x1x4x256xf32, #tpu.memory_space<vmem>>, %arg3: memref<2x1x4x256xf32, #tpu.memory_space<vmem>>, %arg4: memref<1x4x3xf32, #tpu.memory_space<vmem>>, %arg5: memref<1x4x3xf32, #tpu.memory_space<vmem>>, %arg6: memref<2x1x4x512xf32, #tpu.memory_space<vmem>>) attributes {dimension_semantics = [#tpu.dimension_semantics<parallel>, #tpu.dimension_semantics<parallel>], iteration_bounds = array<i64: 1, 4>, scalar_prefetch = 0 : i64, scratch_operands = 0 : i64, tpu.core_type = #tpu.core_type<tc>, window_params = [{transform_indices = @transform_0, window_bounds = array<i64: 2, 1, 4, 256>}, {transform_indices = @transform_1, window_bounds = array<i64: 2, 1, 4, 256>}, {transform_indices = @transform_2, window_bounds = array<i64: 1, 4, 3>}, {transform_indices = @transform_3, window_bounds = array<i64: 1, 4, 3>}, {transform_indices = @transform_4, window_bounds = array<i64: 2, 1, 4, 512>}]} {
    %c0 = arith.constant 0 : index
    %c0_0 = arith.constant 0 : index
    %c0_1 = arith.constant 0 : index
    %c0_2 = arith.constant 0 : index
    %0 = vector.load %arg2[%c0, %c0_0, %c0_1, %c0_2] : memref<2x1x4x256xf32, #tpu.memory_space<vmem>>, vector<2x1x4x256xf32>
    %1 = vector.shape_cast %0 : vector<2x1x4x256xf32> to vector<2x4x256xf32>
    %c0_3 = arith.constant 0 : index
    %c0_4 = arith.constant 0 : index
    %c0_5 = arith.constant 0 : index
    %2 = vector.load %arg4[%c0_3, %c0_4, %c0_5] : memref<1x4x3xf32, #tpu.memory_space<vmem>>, vector<1x4x3xf32>
    %3 = vector.shape_cast %2 : vector<1x4x3xf32> to vector<4x3xf32>
    %4 = vector.extract_strided_slice %3 {offsets = [0, 0], sizes = [4, 1], strides = [1, 1]} : vector<4x3xf32> to vector<4x1xf32>
    %5 = vector.shape_cast %4 : vector<4x1xf32> to vector<1x4x1xf32>
    %6 = vector.extract_strided_slice %3 {offsets = [0, 1], sizes = [4, 1], strides = [1, 1]} : vector<4x3xf32> to vector<4x1xf32>
    %7 = vector.shape_cast %6 : vector<4x1xf32> to vector<1x4x1xf32>
    %8 = vector.extract_strided_slice %3 {offsets = [0, 2], sizes = [4, 1], strides = [1, 1]} : vector<4x3xf32> to vector<4x1xf32>
    %9 = vector.shape_cast %8 : vector<4x1xf32> to vector<1x4x1xf32>
    %cst = arith.constant dense<0.000000e+00> : vector<2x4xf32>
    %10 = vector.multi_reduction <add>, %1, %cst [2] : vector<2x4x256xf32> to vector<2x4xf32>
    %11 = vector.shape_cast %10 : vector<2x4xf32> to vector<2x4x1xf32>
    %12 = arith.mulf %1, %1 : vector<2x4x256xf32>
    %cst_6 = arith.constant dense<0.000000e+00> : vector<2x4xf32>
    %13 = vector.multi_reduction <add>, %12, %cst_6 [2] : vector<2x4x256xf32> to vector<2x4xf32>
    %14 = vector.shape_cast %13 : vector<2x4xf32> to vector<2x4x1xf32>
    %cst_7 = arith.constant 3.906250e-03 : f32
    %15 = vector.broadcast %cst_7 : f32 to vector<2x4x1xf32>
    %16 = arith.mulf %11, %15 : vector<2x4x1xf32>
    %cst_8 = arith.constant 3.906250e-03 : f32
    %17 = vector.broadcast %cst_8 : f32 to vector<2x4x1xf32>
    %18 = arith.mulf %14, %17 : vector<2x4x1xf32>
    %19 = arith.mulf %16, %16 : vector<2x4x1xf32>
    %20 = arith.subf %18, %19 : vector<2x4x1xf32>
    %cst_9 = arith.constant 0.000000e+00 : f32
    %21 = vector.broadcast %cst_9 : f32 to vector<2x4x1xf32>
    %22 = arith.maximumf %20, %21 : vector<2x4x1xf32>
    %cst_10 = arith.constant 9.99999974E-6 : f32
    %23 = vector.broadcast %cst_10 : f32 to vector<2x4x1xf32>
    %24 = arith.addf %22, %23 : vector<2x4x1xf32>
    %25 = math.rsqrt %24 : vector<2x4x1xf32>
    %26 = vector.broadcast %5 : vector<1x4x1xf32> to vector<2x4x1xf32>
    %27 = arith.mulf %26, %25 : vector<2x4x1xf32>
    %28 = vector.broadcast %7 : vector<1x4x1xf32> to vector<2x4x1xf32>
    %29 = arith.subf %28, %27 : vector<2x4x1xf32>
    %30 = arith.mulf %29, %16 : vector<2x4x1xf32>
    %31 = vector.broadcast %9 : vector<1x4x1xf32> to vector<2x4x1xf32>
    %32 = arith.addf %30, %31 : vector<2x4x1xf32>
    %33 = vector.broadcast %27 : vector<2x4x1xf32> to vector<2x4x256xf32>
    %34 = arith.mulf %1, %33 : vector<2x4x256xf32>
    %35 = vector.broadcast %32 : vector<2x4x1xf32> to vector<2x4x256xf32>
    %36 = arith.addf %34, %35 : vector<2x4x256xf32>
    %cst_11 = arith.constant 5.000000e-01 : f32
    %37 = vector.broadcast %cst_11 : f32 to vector<2x4x256xf32>
    %38 = arith.mulf %37, %36 : vector<2x4x256xf32>
    %39 = math.tanh %38 : vector<2x4x256xf32>
    %cst_12 = arith.constant 5.000000e-01 : f32
    %40 = vector.broadcast %cst_12 : f32 to vector<2x4x256xf32>
    %41 = arith.mulf %40, %39 : vector<2x4x256xf32>
    %cst_13 = arith.constant 5.000000e-01 : f32
    %42 = vector.broadcast %cst_13 : f32 to vector<2x4x256xf32>
    %43 = arith.addf %41, %42 : vector<2x4x256xf32>
    %44 = arith.mulf %1, %43 : vector<2x4x256xf32>
    %c0_14 = arith.constant 0 : index
    %c0_15 = arith.constant 0 : index
    %c0_16 = arith.constant 0 : index
    %c0_17 = arith.constant 0 : index
    %45 = vector.load %arg3[%c0_14, %c0_15, %c0_16, %c0_17] : memref<2x1x4x256xf32, #tpu.memory_space<vmem>>, vector<2x1x4x256xf32>
    %46 = vector.shape_cast %45 : vector<2x1x4x256xf32> to vector<2x4x256xf32>
    %c0_18 = arith.constant 0 : index
    %c0_19 = arith.constant 0 : index
    %c0_20 = arith.constant 0 : index
    %47 = vector.load %arg5[%c0_18, %c0_19, %c0_20] : memref<1x4x3xf32, #tpu.memory_space<vmem>>, vector<1x4x3xf32>
    %48 = vector.shape_cast %47 : vector<1x4x3xf32> to vector<4x3xf32>
    %49 = vector.extract_strided_slice %48 {offsets = [0, 0], sizes = [4, 1], strides = [1, 1]} : vector<4x3xf32> to vector<4x1xf32>
    %50 = vector.shape_cast %49 : vector<4x1xf32> to vector<1x4x1xf32>
    %51 = vector.extract_strided_slice %48 {offsets = [0, 1], sizes = [4, 1], strides = [1, 1]} : vector<4x3xf32> to vector<4x1xf32>
    %52 = vector.shape_cast %51 : vector<4x1xf32> to vector<1x4x1xf32>
    %53 = vector.extract_strided_slice %48 {offsets = [0, 2], sizes = [4, 1], strides = [1, 1]} : vector<4x3xf32> to vector<4x1xf32>
    %54 = vector.shape_cast %53 : vector<4x1xf32> to vector<1x4x1xf32>
    %cst_21 = arith.constant dense<0.000000e+00> : vector<2x4xf32>
    %55 = vector.multi_reduction <add>, %46, %cst_21 [2] : vector<2x4x256xf32> to vector<2x4xf32>
    %56 = vector.shape_cast %55 : vector<2x4xf32> to vector<2x4x1xf32>
    %57 = arith.mulf %46, %46 : vector<2x4x256xf32>
    %cst_22 = arith.constant dense<0.000000e+00> : vector<2x4xf32>
    %58 = vector.multi_reduction <add>, %57, %cst_22 [2] : vector<2x4x256xf32> to vector<2x4xf32>
    %59 = vector.shape_cast %58 : vector<2x4xf32> to vector<2x4x1xf32>
    %cst_23 = arith.constant 3.906250e-03 : f32
    %60 = vector.broadcast %cst_23 : f32 to vector<2x4x1xf32>
    %61 = arith.mulf %56, %60 : vector<2x4x1xf32>
    %cst_24 = arith.constant 3.906250e-03 : f32
    %62 = vector.broadcast %cst_24 : f32 to vector<2x4x1xf32>
    %63 = arith.mulf %59, %62 : vector<2x4x1xf32>
    %64 = arith.mulf %61, %61 : vector<2x4x1xf32>
    %65 = arith.subf %63, %64 : vector<2x4x1xf32>
    %cst_25 = arith.constant 0.000000e+00 : f32
    %66 = vector.broadcast %cst_25 : f32 to vector<2x4x1xf32>
    %67 = arith.maximumf %65, %66 : vector<2x4x1xf32>
    %cst_26 = arith.constant 9.99999974E-6 : f32
    %68 = vector.broadcast %cst_26 : f32 to vector<2x4x1xf32>
    %69 = arith.addf %67, %68 : vector<2x4x1xf32>
    %70 = math.rsqrt %69 : vector<2x4x1xf32>
    %71 = vector.broadcast %50 : vector<1x4x1xf32> to vector<2x4x1xf32>
    %72 = arith.mulf %71, %70 : vector<2x4x1xf32>
    %73 = vector.broadcast %52 : vector<1x4x1xf32> to vector<2x4x1xf32>
    %74 = arith.subf %73, %72 : vector<2x4x1xf32>
    %75 = arith.mulf %74, %61 : vector<2x4x1xf32>
    %76 = vector.broadcast %54 : vector<1x4x1xf32> to vector<2x4x1xf32>
    %77 = arith.addf %75, %76 : vector<2x4x1xf32>
    %78 = vector.broadcast %72 : vector<2x4x1xf32> to vector<2x4x256xf32>
    %79 = arith.mulf %46, %78 : vector<2x4x256xf32>
    %80 = vector.broadcast %77 : vector<2x4x1xf32> to vector<2x4x256xf32>
    %81 = arith.addf %79, %80 : vector<2x4x256xf32>
    %cst_27 = arith.constant 5.000000e-01 : f32
    %82 = vector.broadcast %cst_27 : f32 to vector<2x4x256xf32>
    %83 = arith.mulf %82, %81 : vector<2x4x256xf32>
    %84 = math.tanh %83 : vector<2x4x256xf32>
    %cst_28 = arith.constant 5.000000e-01 : f32
    %85 = vector.broadcast %cst_28 : f32 to vector<2x4x256xf32>
    %86 = arith.mulf %85, %84 : vector<2x4x256xf32>
    %cst_29 = arith.constant 5.000000e-01 : f32
    %87 = vector.broadcast %cst_29 : f32 to vector<2x4x256xf32>
    %88 = arith.addf %86, %87 : vector<2x4x256xf32>
    %89 = arith.mulf %46, %88 : vector<2x4x256xf32>
    %90 = tpu.concatenate %44, %89 in 2 : vector<2x4x256xf32>, vector<2x4x256xf32> -> vector<2x4x512xf32>
    %c0_30 = arith.constant 0 : index
    %c0_31 = arith.constant 0 : index
    %c0_32 = arith.constant 0 : index
    %c0_33 = arith.constant 0 : index
    %91 = vector.load %arg6[%c0_30, %c0_31, %c0_32, %c0_33] : memref<2x1x4x512xf32, #tpu.memory_space<vmem>>, vector<2x1x4x512xf32>
    %92 = vector.shape_cast %91 : vector<2x1x4x512xf32> to vector<2x4x512xf32>
    %93 = vector.shape_cast %90 : vector<2x4x512xf32> to vector<2x1x4x512xf32>
    tpu.vector_store %arg6[%c0_30, %c0_31, %c0_32, %c0_33], %93 {strides = array<i32>} : memref<2x1x4x512xf32, #tpu.memory_space<vmem>>, vector<2x1x4x512xf32>,
    return
  }
  func.func @transform_0(%arg0: i32, %arg1: i32) -> (i32, i32, i32, i32) {
    %c0_i32 = arith.constant 0 : i32
    %c0_i32_0 = arith.constant 0 : i32
    %c0_i32_1 = arith.constant 0 : i32
    return %arg0, %arg1, %c0_i32, %c0_i32_0 : i32, i32, i32, i32
  }
  func.func @transform_1(%arg0: i32, %arg1: i32) -> (i32, i32, i32, i32) {
    %c4_i32 = arith.constant 4 : i32
    %0 = arith.addi %c4_i32, %arg1 : i32
    %c0_i32 = arith.constant 0 : i32
    %c0_i32_0 = arith.constant 0 : i32
    %c0_i32_1 = arith.constant 0 : i32
    return %arg0, %0, %c0_i32, %c0_i32_0 : i32, i32, i32, i32
  }
  func.func @transform_2(%arg0: i32, %arg1: i32) -> (i32, i32, i32) {
    %c2_i32 = arith.constant 2 : i32
    %c0_i32 = arith.constant 0 : i32
    %0 = arith.cmpi eq, %c2_i32, %c0_i32 : i32
    %c1_i32 = arith.constant 1 : i32
    %1 = arith.select %0, %c1_i32, %c2_i32 : i32
    %2 = arith.remsi %arg1, %1 : i32
    %c0_i32_0 = arith.constant 0 : i32
    %3 = arith.cmpi ne, %2, %c0_i32_0 : i32
    %c0_i32_1 = arith.constant 0 : i32
    %4 = arith.cmpi slt, %2, %c0_i32_1 : i32
    %c0_i32_2 = arith.constant 0 : i32
    %5 = arith.cmpi slt, %1, %c0_i32_2 : i32
    %6 = arith.xori %4, %5 : i1
    %7 = arith.andi %6, %3 : i1
    %8 = arith.addi %2, %1 : i32
    %9 = arith.select %7, %8, %2 : i32
    %c0_i32_3 = arith.constant 0 : i32
    %c0_i32_4 = arith.constant 0 : i32
    %c0_i32_5 = arith.constant 0 : i32
    return %9, %c0_i32_3, %c0_i32_4 : i32, i32, i32
  }
  func.func @transform_3(%arg0: i32, %arg1: i32) -> (i32, i32, i32) {
    %c4_i32 = arith.constant 4 : i32
    %0 = arith.addi %c4_i32, %arg1 : i32
    %c2_i32 = arith.constant 2 : i32
    %c0_i32 = arith.constant 0 : i32
    %1 = arith.cmpi eq, %c2_i32, %c0_i32 : i32
    %c1_i32 = arith.constant 1 : i32
    %2 = arith.select %1, %c1_i32, %c2_i32 : i32
    %3 = arith.remsi %0, %2 : i32
    %c0_i32_0 = arith.constant 0 : i32
    %4 = arith.cmpi ne, %3, %c0_i32_0 : i32
    %c0_i32_1 = arith.constant 0 : i32
    %5 = arith.cmpi slt, %3, %c0_i32_1 : i32
    %c0_i32_2 = arith.constant 0 : i32
    %6 = arith.cmpi slt, %2, %c0_i32_2 : i32
    %7 = arith.xori %5, %6 : i1
    %8 = arith.andi %7, %4 : i1
    %9 = arith.addi %3, %2 : i32
    %10 = arith.select %8, %9, %3 : i32
    %c0_i32_3 = arith.constant 0 : i32
    %c0_i32_4 = arith.constant 0 : i32
    %c0_i32_5 = arith.constant 0 : i32
    return %10, %c0_i32_3, %c0_i32_4 : i32, i32, i32
  }
  func.func @transform_4(%arg0: i32, %arg1: i32) -> (i32, i32, i32, i32) {
    %c0_i32 = arith.constant 0 : i32
    %c0_i32_0 = arith.constant 0 : i32
    %c0_i32_1 = arith.constant 0 : i32
    return %arg0, %arg1, %c0_i32, %c0_i32_0 : i32, i32, i32, i32
  }
}

</mosaic_0001>

<llo_original>
// kernel: shuffle_attention_pallas.1
$region0: #{shuffle_attention_pallas.1}
  #allocation0 [shape = 'u32[]', space=smem, size = 0x4, offset = 0x4, fixed_abs, tag = 'smem constant byte address 0x4 - core index']
  #allocation1 [shape = 'u32[144,128]{1,0:T(1,128)}', space=vmem, size = 0x12000, scoped, tag = 'internal scratch']
  %s0 = inlined_call_operand.vmem [shape: f32[2,8,4,256], index: 0, kind: input, shape index: {}, may-alias: {0,1}]
  %s1 = inlined_call_operand.vmem [shape: f32[2,8,4,256], index: 1, kind: input, shape index: {}, may-alias: {0,1}]
  %s2 = inlined_call_operand.vmem [shape: f32[2,4,3], index: 2, kind: input, shape index: {}, may-alias: {2,3}]
  %s3 = inlined_call_operand.vmem [shape: f32[2,4,3], index: 3, kind: input, shape index: {}, may-alias: {2,3}]
  %s4 = inlined_call_operand.vmem [shape: f32[2,4,4,512], index: 4, kind: output, shape index: {}]
  %s5 = sld [smem:[#allocation0]]
  $region144: #{shuffle_attention_pallas.1} parent=0
    _
  %s7 = ssub.s32 1, %s5
  %s8 = scalar_select 0, %s7, %s5
  $region1: #{shuffle_attention_pallas.1} parent=0
    #allocation2 [shape = 'u8[16384]{0}', space=vmem, size = 0x4000, scoped, tag = 'input window, operand 0']
    #allocation3 [shape = 'u8[16384]{0}', space=vmem, size = 0x4000, scoped, tag = 'input window, operand 1']
    #allocation4 [shape = 'u8[32768]{0}', space=vmem, size = 0x8000, scoped, tag = 'output window, operand 0']
    loop: start=0, step=1, limit=6
    $region2: #{shuffle_attention_pallas.1} parent=1 // loop_pre_header
      _
    $region3: #{shuffle_attention_pallas.1} parent=1 // loop_header
      %s10 = sphi 0, %s14
      %p11 = scmp.ge.s32.totalorder %s10, 6
      %s17 = sphi 0, %s29
      %s18 = sphi 0, %s25
      %s19 = sphi 0, %s17
      %s20 = sphi 0, %s18
      %s21 = sphi 0, %s19
      %s22 = sphi 0, %s20
      %s34 = sphi 0, %s36
      %s37 = sphi 0, %s34
      %s38 = sphi 0, %s37
      %s54 = sphi 0, %s38
      %s64 = sphi 0, %s66
      %s67 = sphi 0, %s64
      %s68 = sphi 0, %s67
      %s84 = sphi 0, %s68
      %s114 = sphi 0, %s116
      %s117 = sphi 0, %s114
      %s118 = sphi 0, %s117
      %s134 = sphi 0, %s118
      %s166 = sphi 0, %s168
      %s169 = sphi 0, %s166
      %s170 = sphi 0, %s169
      %s186 = sphi 0, %s170
      %s194 = sphi 0, %s196
      %s197 = sphi 0, %s194
      %s198 = sphi 0, %s197
      %s214 = sphi 0, %s198
    $region4: #{shuffle_attention_pallas.1} parent=1 // loop_header_branch
      %13 = sbr.rel (%p11) target = $region8
    $region5: #{shuffle_attention_pallas.1} parent=1 // loop_body
      %s15 = ssub.s32 %s10, 1
      %s16 = ssub.s32 %s10, 2
      %s23 = sadd.s32 1, %s18
      %p24 = scmp.ge.s32.totalorder %s23, 4
      %s25 = scalar_select %p24, 0, %s23
      %s26 = sadd.s32 1, %s17
      %s27 = scalar_select %p24, %s26, %s17
      %p28 = scmp.ge.s32.totalorder %s27, 1
      %s29 = scalar_select %p28, 0, %s27
      %s30 = ssub.s32 %s17, %s29
      %s31 = ssub.s32 %s18, %s25
      %s32 = sor.u32 %s30, %s31
      %p33 = scmp.eq.s32.totalorder %s32, 0
      %s35 = sadd.s32 %s34, 1
      %s36 = scalar_select %p33, %s34, %s35
      %p39 = pneg %p33
      %p40 = scmp.eq.s32.totalorder %s10, 3
      %p41 = por %p39, %p40
      %p42 = scmp.ne.s32.totalorder %s34, %s37
      %p43 = scmp.eq.s32.totalorder %s10, 0
      %p44 = por %p42, %p43
      %p45 = scmp.ne.s32.totalorder %s34, %s37
      %p46 = scmp.eq.s32.totalorder %s15, 3
      %p47 = por %p45, %p46
      %p48 = scmp.ne.s32.totalorder %s37, %s38
      %p49 = scmp.eq.s32.totalorder %s15, 0
      %p50 = por %p48, %p49
      %p51 = scmp.ne.s32.totalorder %s37, %s38
      %p52 = scmp.eq.s32.totalorder %s16, 3
      %p53 = por %p51, %p52
      %p55 = scmp.ne.s32.totalorder %s38, %s54
      %p56 = scmp.eq.s32.totalorder %s16, 0
      %p57 = por %p55, %p56
      %s58 = sadd.s32 %s18, 4
      %s59 = sadd.s32 %s25, 4
      %s60 = ssub.s32 %s17, %s29
      %s61 = ssub.s32 %s58, %s59
      %s62 = sor.u32 %s60, %s61
      %p63 = scmp.eq.s32.totalorder %s62, 0
      %s65 = sadd.s32 %s64, 1
      %s66 = scalar_select %p63, %s64, %s65
      %p69 = pneg %p63
      %p70 = scmp.eq.s32.totalorder %s10, 3
      %p71 = por %p69, %p70
      %p72 = scmp.ne.s32.totalorder %s64, %s67
      %p73 = scmp.eq.s32.totalorder %s10, 0
      %p74 = por %p72, %p73
      %p75 = scmp.ne.s32.totalorder %s64, %s67
      %p76 = scmp.eq.s32.totalorder %s15, 3
      %p77 = por %p75, %p76
      %p78 = scmp.ne.s32.totalorder %s67, %s68
      %p79 = scmp.eq.s32.totalorder %s15, 0
      %p80 = por %p78, %p79
      %p81 = scmp.ne.s32.totalorder %s67, %s68
      %p82 = scmp.eq.s32.totalorder %s16, 3
      %p83 = por %p81, %p82
      %p85 = scmp.ne.s32.totalorder %s68, %s84
      %p86 = scmp.eq.s32.totalorder %s16, 0
      %p87 = por %p85, %p86
      %p88 = scmp.lt.s32.totalorder %s18, 0
      %s89 = ssub.s32 0, %s18
      %s90 = scalar_select %p88, %s89, %s18
      %s91 = sand.u32 %s90, 1
      %s92 = ssub.s32 0, %s91
      %s93 = scalar_select %p88, %s92, %s91
      %p94 = scmp.ne.s32.totalorder %s93, 0
      %p95 = scmp.lt.s32.totalorder %s93, 0
      %p96 = pnand %p95, %p94
      %p97 = pneg %p96
      %s98 = sadd.s32 %s93, 2
      %s99 = scalar_select %p97, %s98, %s93
      %p100 = scmp.lt.s32.totalorder %s25, 0
      %s101 = ssub.s32 0, %s25
      %s102 = scalar_select %p100, %s101, %s25
      %s103 = sand.u32 %s102, 1
      %s104 = ssub.s32 0, %s103
      %s105 = scalar_select %p100, %s104, %s103
      %p106 = scmp.ne.s32.totalorder %s105, 0
      %p107 = scmp.lt.s32.totalorder %s105, 0
      %p108 = pnand %p107, %p106
      %p109 = pneg %p108
      %s110 = sadd.s32 %s105, 2
      %s111 = scalar_select %p109, %s110, %s105
      %s112 = ssub.s32 %s99, %s111
      %p113 = scmp.eq.s32.totalorder %s112, 0
      %s115 = sadd.s32 %s114, 1
      %s116 = scalar_select %p113, %s114, %s115
      %p119 = pneg %p113
      %p120 = scmp.eq.s32.totalorder %s10, 3
      %p121 = por %p119, %p120
      %p122 = scmp.ne.s32.totalorder %s114, %s117
      %p123 = scmp.eq.s32.totalorder %s10, 0
      %p124 = por %p122, %p123
      %p125 = scmp.ne.s32.totalorder %s114, %s117
      %p126 = scmp.eq.s32.totalorder %s15, 3
      %p127 = por %p125, %p126
      %p128 = scmp.ne.s32.totalorder %s117, %s118
      %p129 = scmp.eq.s32.totalorder %s15, 0
      %p130 = por %p128, %p129
      %p131 = scmp.ne.s32.totalorder %s117, %s118
      %p132 = scmp.eq.s32.totalorder %s16, 3
      %p133 = por %p131, %p132
      %p135 = scmp.ne.s32.totalorder %s118, %s134
      %p136 = scmp.eq.s32.totalorder %s16, 0
      %p137 = por %p135, %p136
      %s138 = sadd.s32 %s18, 4
      %p139 = scmp.lt.s32.totalorder %s138, 0
      %s140 = ssub.s32 0, %s138
      %s141 = scalar_select %p139, %s140, %s138
      %s142 = sand.u32 %s141, 1
      %s143 = ssub.s32 0, %s142
      %s144 = scalar_select %p139, %s143, %s142
      %p145 = scmp.ne.s32.totalorder %s144, 0
      %p146 = scmp.lt.s32.totalorder %s144, 0
      %p147 = pnand %p146, %p145
      %p148 = pneg %p147
      %s149 = sadd.s32 %s144, 2
      %s150 = scalar_select %p148, %s149, %s144
      %s151 = sadd.s32 %s25, 4
      %p152 = scmp.lt.s32.totalorder %s151, 0
      %s153 = ssub.s32 0, %s151
      %s154 = scalar_select %p152, %s153, %s151
      %s155 = sand.u32 %s154, 1
      %s156 = ssub.s32 0, %s155
      %s157 = scalar_select %p152, %s156, %s155
      %p158 = scmp.ne.s32.totalorder %s157, 0
      %p159 = scmp.lt.s32.totalorder %s157, 0
      %p160 = pnand %p159, %p158
      %p161 = pneg %p160
      %s162 = sadd.s32 %s157, 2
      %s163 = scalar_select %p161, %s162, %s157
      %s164 = ssub.s32 %s150, %s163
      %p165 = scmp.eq.s32.totalorder %s164, 0
      %s167 = sadd.s32 %s166, 1
      %s168 = scalar_select %p165, %s166, %s167
      %p171 = pneg %p165
      %p172 = scmp.eq.s32.totalorder %s10, 3
      %p173 = por %p171, %p172
      %p174 = scmp.ne.s32.totalorder %s166, %s169
      %p175 = scmp.eq.s32.totalorder %s10, 0
      %p176 = por %p174, %p175
      %p177 = scmp.ne.s32.totalorder %s166, %s169
      %p178 = scmp.eq.s32.totalorder %s15, 3
      %p179 = por %p177, %p178
      %p180 = scmp.ne.s32.totalorder %s169, %s170
      %p181 = scmp.eq.s32.totalorder %s15, 0
      %p182 = por %p180, %p181
      %p183 = scmp.ne.s32.totalorder %s169, %s170
      %p184 = scmp.eq.s32.totalorder %s16, 3
      %p185 = por %p183, %p184
      %p187 = scmp.ne.s32.totalorder %s170, %s186
      %p188 = scmp.eq.s32.totalorder %s16, 0
      %p189 = por %p187, %p188
      %s190 = ssub.s32 %s17, %s29
      %s191 = ssub.s32 %s18, %s25
      %s192 = sor.u32 %s190, %s191
      %p193 = scmp.eq.s32.totalorder %s192, 0
      %s195 = sadd.s32 %s194, 1
      %s196 = scalar_select %p193, %s194, %s195
      %p199 = pneg %p193
      %p200 = scmp.eq.s32.totalorder %s10, 3
      %p201 = por %p199, %p200
      %p202 = scmp.ne.s32.totalorder %s194, %s197
      %p203 = scmp.eq.s32.totalorder %s10, 0
      %p204 = por %p202, %p203
      %p205 = scmp.ne.s32.totalorder %s194, %s197
      %p206 = scmp.eq.s32.totalorder %s15, 3
      %p207 = por %p205, %p206
      %p208 = scmp.ne.s32.totalorder %s197, %s198
      %p209 = scmp.eq.s32.totalorder %s15, 0
      %p210 = por %p208, %p209
      %p211 = scmp.ne.s32.totalorder %s197, %s198
      %p212 = scmp.eq.s32.totalorder %s16, 3
      %p213 = por %p211, %p212
      %p215 = scmp.ne.s32.totalorder %s198, %s214
      %p216 = scmp.eq.s32.totalorder %s16, 0
      %p217 = por %p215, %p216
      %p218 = scmp.le.s32.totalorder 1, %s10
      %p219 = scmp.lt.s32.totalorder %s10, 5
      %p220 = pnand %p218, %p219
      %p221 = pneg %p220
      // Predicated region
      $region9: #{shuffle_attention_pallas.1} parent=5 // pred_check
        _
      $region10: #{shuffle_attention_pallas.1} parent=5 // pred_check_branch
        %223 = sbr.rel (%p220) target = $region12
      $region11: #{shuffle_attention_pallas.1} parent=5 // pred_region
        %s224 = ssub.s32 %s10, 1
      $region12: #{shuffle_attention_pallas.1} parent=5 // pred_fallthru
        _
      %p225 = scmp.lt.s32.totalorder %s10, 4
      // Predicated region
      $region13: #{shuffle_attention_pallas.1} parent=5 // pred_check
        %p226 = pneg %p225
      $region14: #{shuffle_attention_pallas.1} parent=5 // pred_check_branch
        %228 = sbr.rel (%p226) target = $region16
      $region15: #{shuffle_attention_pallas.1} parent=5 // pred_region
        // Predicated region
        $region17: #{shuffle_attention_pallas.1} parent=15 // pred_check
          %p229 = pneg %p44
        $region18: #{shuffle_attention_pallas.1} parent=15 // pred_check_branch
          %231 = sbr.rel (%p229) target = $region20
        $region19: #{shuffle_attention_pallas.1} parent=15 // pred_region
          %s232 = sand.u32 %s34, 1
          %s233 = sand.u32 %s34, 1
          %s234 = smul.addr %s233, 16
          %s235 = scalar_lea.vmem [#allocation2], %s234
          %s236 = smul.u32 2, %s17
          %s237 = smul.addr %s18, 2
          %s238 = smul.addr %s236, 16
          %s239 = sadd.s32 %s237, %s238
          %s240 = smul.addr %s239, 4
          %s241 = scalar_lea.vmem %s0, %s240
          // Predicated region
          $region21: #{shuffle_attention_pallas.1} parent=19 // pred_check
            _
          $region22: #{shuffle_attention_pallas.1} parent=19 // pred_check_branch
            %243 = sbr.rel (0) target = $region24
          $region23: #{shuffle_attention_pallas.1} parent=19 // pred_region
            // Predicated region
            $region25: #{shuffle_attention_pallas.1} parent=23 // pred_check
              _
            $region26: #{shuffle_attention_pallas.1} parent=23 // pred_check_branch
              %245 = sbr.rel (0) target = $region28
            $region27: #{shuffle_attention_pallas.1} parent=23 // pred_region
              // Predicated region
              $region40: #{shuffle_attention_pallas.1} parent=27 // pred_check
                _
              $region41: #{shuffle_attention_pallas.1} parent=27 // pred_check_branch
                %263 = sbr.rel (0) target = $region43
              $region42: #{shuffle_attention_pallas.1} parent=27 // pred_region
                loop: start=0, step=1, limit=1
                $region44: #{shuffle_attention_pallas.1} parent=42 // loop_pre_header
                  _
                $region45: #{shuffle_attention_pallas.1} parent=42 // loop_header
                  %s265 = sphi 0, %s269
                  %p266 = scmp.ge.s32.totalorder %s265, 1
                  %s270 = sphi %s241, %s241
                  %s271 = sphi %s235, %s235
                $region46: #{shuffle_attention_pallas.1} parent=42 // loop_header_branch
                  %268 = sbr.rel (%p266) target = $region50
                $region47: #{shuffle_attention_pallas.1} parent=42 // loop_body
                  %v272 = vld [vmem:[%s270] sm:$0xff]
                  %273 = vst [vmem:[%s271] sm:$0xff] %v272
                  %v274 = vld [vmem:[%s270 + $0x40] sm:$0xff]
                  %275 = vst [vmem:[%s271 + $0x8] sm:$0xff] %v274
                $region48: #{shuffle_attention_pallas.1} parent=42 // loop_footer
                  %s269 = sadd.s32 1, %s265
                $region49: #{shuffle_attention_pallas.1} parent=42 // loop_footer_branch
                  %264 = sbr.rel target = $region45
                $region50: #{shuffle_attention_pallas.1} parent=42 // loop_exit
                  _
              $region43: #{shuffle_attention_pallas.1} parent=27 // pred_fallthru
                _
              // Predicated region
              $region51: #{shuffle_attention_pallas.1} parent=27 // pred_check
                _
              $region52: #{shuffle_attention_pallas.1} parent=27 // pred_check_branch
                %277 = sbr.rel target = $region54
              $region53: #{shuffle_attention_pallas.1} parent=27 // pred_region
                _
              $region54: #{shuffle_attention_pallas.1} parent=27 // pred_fallthru
                _
            $region28: #{shuffle_attention_pallas.1} parent=23 // pred_fallthru
              _
            // Predicated region
            $region29: #{shuffle_attention_pallas.1} parent=23 // pred_check
              _
            $region30: #{shuffle_attention_pallas.1} parent=23 // pred_check_branch
              %247 = sbr.rel target = $region32
            $region31: #{shuffle_attention_pallas.1} parent=23 // pred_region
              %s249 = ssub.s32 256, 1
              loop: start=0, step=1, limit=1
              $region33: #{shuffle_attention_pallas.1} parent=31 // loop_pre_header
                _
              $region34: #{shuffle_attention_pallas.1} parent=31 // loop_header
                %s251 = sphi 0, %s255
                %p252 = scmp.ge.s32.totalorder %s251, 1
                %s256 = sphi %s241, %s241
                %s257 = sphi %s235, %s235
              $region35: #{shuffle_attention_pallas.1} parent=31 // loop_header_branch
                %254 = sbr.rel (%p252) target = $region39
              $region36: #{shuffle_attention_pallas.1} parent=31 // loop_body
                %v258 = vld [vmem:[%s256] sm:%s249]
                %259 = vst [vmem:[%s257] sm:%s249] %v258
                %v260 = vld [vmem:[%s256 + $0x40] sm:%s249]
                %261 = vst [vmem:[%s257 + $0x8] sm:%s249] %v260
              $region37: #{shuffle_attention_pallas.1} parent=31 // loop_footer
                %s255 = sadd.s32 1, %s251
              $region38: #{shuffle_attention_pallas.1} parent=31 // loop_footer_branch
                %250 = sbr.rel target = $region34
              $region39: #{shuffle_attention_pallas.1} parent=31 // loop_exit
                _
            $region32: #{shuffle_attention_pallas.1} parent=23 // pred_fallthru
              _
          $region24: #{shuffle_attention_pallas.1} parent=19 // pred_fallthru
            _
          %278 = vnop
        $region20: #{shuffle_attention_pallas.1} parent=15 // pred_fallthru
          _
        // Predicated region
        $region55: #{shuffle_attention_pallas.1} parent=15 // pred_check
          %p279 = pneg %p74
        $region56: #{shuffle_attention_pallas.1} parent=15 // pred_check_branch
          %281 = sbr.rel (%p279) target = $region58
        $region57: #{shuffle_attention_pallas.1} parent=15 // pred_region
          %s282 = sand.u32 %s64, 1
          %s283 = sand.u32 %s64, 1
          %s284 = smul.addr %s283, 16
          %s285 = scalar_lea.vmem [#allocation3], %s284
          %s286 = sadd.s32 %s18, 4
          %s287 = smul.u32 2, %s17
          %s288 = smul.addr %s286, 2
          %s289 = smul.addr %s287, 16
          %s290 = sadd.s32 %s288, %s289
          %s291 = smul.addr %s290, 4
          %s292 = scalar_lea.vmem %s1, %s291
          // Predicated region
          $region59: #{shuffle_attention_pallas.1} parent=57 // pred_check
            _
          $region60: #{shuffle_attention_pallas.1} parent=57 // pred_check_branch
            %294 = sbr.rel (0) target = $region62
          $region61: #{shuffle_attention_pallas.1} parent=57 // pred_region
            // Predicated region
            $region63: #{shuffle_attention_pallas.1} parent=61 // pred_check
              _
            $region64: #{shuffle_attention_pallas.1} parent=61 // pred_check_branch
              %296 = sbr.rel (0) target = $region66
            $region65: #{shuffle_attention_pallas.1} parent=61 // pred_region
              // Predicated region
              $region78: #{shuffle_attention_pallas.1} parent=65 // pred_check
                _
              $region79: #{shuffle_attention_pallas.1} parent=65 // pred_check_branch
                %314 = sbr.rel (0) target = $region81
              $region80: #{shuffle_attention_pallas.1} parent=65 // pred_region
                loop: start=0, step=1, limit=1
                $region82: #{shuffle_attention_pallas.1} parent=80 // loop_pre_header
                  _
                $region83: #{shuffle_attention_pallas.1} parent=80 // loop_header
                  %s316 = sphi 0, %s320
                  %p317 = scmp.ge.s32.totalorder %s316, 1
                  %s321 = sphi %s292, %s292
                  %s322 = sphi %s285, %s285
                $region84: #{shuffle_attention_pallas.1} parent=80 // loop_header_branch
                  %319 = sbr.rel (%p317) target = $region88
                $region85: #{shuffle_attention_pallas.1} parent=80 // loop_body
                  %v323 = vld [vmem:[%s321] sm:$0xff]
                  %324 = vst [vmem:[%s322] sm:$0xff] %v323
                  %v325 = vld [vmem:[%s321 + $0x40] sm:$0xff]
                  %326 = vst [vmem:[%s322 + $0x8] sm:$0xff] %v325
                $region86: #{shuffle_attention_pallas.1} parent=80 // loop_footer
                  %s320 = sadd.s32 1, %s316
                $region87: #{shuffle_attention_pallas.1} parent=80 // loop_footer_branch
                  %315 = sbr.rel target = $region83
                $region88: #{shuffle_attention_pallas.1} parent=80 // loop_exit
                  _
              $region81: #{shuffle_attention_pallas.1} parent=65 // pred_fallthru
                _
              // Predicated region
              $region89: #{shuffle_attention_pallas.1} parent=65 // pred_check
                _
              $region90: #{shuffle_attention_pallas.1} parent=65 // pred_check_branch
                %328 = sbr.rel target = $region92
              $region91: #{shuffle_attention_pallas.1} parent=65 // pred_region
                _
              $region92: #{shuffle_attention_pallas.1} parent=65 // pred_fallthru
                _
            $region66: #{shuffle_attention_pallas.1} parent=61 // pred_fallthru
              _
            // Predicated region
            $region67: #{shuffle_attention_pallas.1} parent=61 // pred_check
              _
            $region68: #{shuffle_attention_pallas.1} parent=61 // pred_check_branch
              %298 = sbr.rel target = $region70
            $region69: #{shuffle_attention_pallas.1} parent=61 // pred_region
              %s300 = ssub.s32 256, 1
              loop: start=0, step=1, limit=1
              $region71: #{shuffle_attention_pallas.1} parent=69 // loop_pre_header
                _
              $region72: #{shuffle_attention_pallas.1} parent=69 // loop_header
                %s302 = sphi 0, %s306
                %p303 = scmp.ge.s32.totalorder %s302, 1
                %s307 = sphi %s292, %s292
                %s308 = sphi %s285, %s285
              $region73: #{shuffle_attention_pallas.1} parent=69 // loop_header_branch
                %305 = sbr.rel (%p303) target = $region77
              $region74: #{shuffle_attention_pallas.1} parent=69 // loop_body
                %v309 = vld [vmem:[%s307] sm:%s300]
                %310 = vst [vmem:[%s308] sm:%s300] %v309
                %v311 = vld [vmem:[%s307 + $0x40] sm:%s300]
                %312 = vst [vmem:[%s308 + $0x8] sm:%s300] %v311
              $region75: #{shuffle_attention_pallas.1} parent=69 // loop_footer
                %s306 = sadd.s32 1, %s302
              $region76: #{shuffle_attention_pallas.1} parent=69 // loop_footer_branch
                %301 = sbr.rel target = $region72
              $region77: #{shuffle_attention_pallas.1} parent=69 // loop_exit
                _
            $region70: #{shuffle_attention_pallas.1} parent=61 // pred_fallthru
              _
          $region62: #{shuffle_attention_pallas.1} parent=57 // pred_fallthru
            _
          %329 = vnop
        $region58: #{shuffle_attention_pallas.1} parent=15 // pred_fallthru
          _
        // Predicated region
        $region93: #{shuffle_attention_pallas.1} parent=15 // pred_check
          %p330 = pneg %p124
        $region94: #{shuffle_attention_pallas.1} parent=15 // pred_check_branch
          %332 = sbr.rel (%p330) target = $region96
        $region95: #{shuffle_attention_pallas.1} parent=15 // pred_region
          %p333 = scmp.lt.s32.totalorder %s18, 0
          %s334 = ssub.s32 0, %s18
          %s335 = scalar_select %p333, %s334, %s18
          %s336 = sand.u32 %s335, 1
          %s337 = ssub.s32 0, %s336
          %s338 = scalar_select %p333, %s337, %s336
          %p339 = scmp.ne.s32.totalorder %s338, 0
          %p340 = scmp.lt.s32.totalorder %s338, 0
          %p341 = pnand %p340, %p339
          %p342 = pneg %p341
          %s343 = sadd.s32 %s338, 2
          %s344 = scalar_select %p342, %s343, %s338
          %p345 = scmp.lt.s32.totalorder %s344, 1
          %s346 = scalar_select %p345, %s344, 1
          %s347 = smul.addr %s346, 4
          %s348 = scalar_lea.vmem %s2, %s347
          %p349 = scmp.lt.s32.totalorder %s18, 0
          %s350 = ssub.s32 0, %s18
          %s351 = scalar_select %p349, %s350, %s18
          %s352 = sand.u32 %s351, 1
          %s353 = ssub.s32 0, %s352
          %s354 = scalar_select %p349, %s353, %s352
          %p355 = scmp.ne.s32.totalorder %s354, 0
          %p356 = scmp.lt.s32.totalorder %s354, 0
          %p357 = pnand %p356, %p355
          %p358 = pneg %p357
          %s359 = sadd.s32 %s354, 2
          %s360 = scalar_select %p358, %s359, %s354
        $region96: #{shuffle_attention_pallas.1} parent=15 // pred_fallthru
          _
        // Predicated region
        $region97: #{shuffle_attention_pallas.1} parent=15 // pred_check
          %p361 = pneg %p176
        $region98: #{shuffle_attention_pallas.1} parent=15 // pred_check_branch
          %363 = sbr.rel (%p361) target = $region100
        $region99: #{shuffle_attention_pallas.1} parent=15 // pred_region
          %s364 = sadd.s32 %s18, 4
          %p365 = scmp.lt.s32.totalorder %s364, 0
          %s366 = ssub.s32 0, %s364
          %s367 = scalar_select %p365, %s366, %s364
          %s368 = sand.u32 %s367, 1
          %s369 = ssub.s32 0, %s368
          %s370 = scalar_select %p365, %s369, %s368
          %p371 = scmp.ne.s32.totalorder %s370, 0
          %p372 = scmp.lt.s32.totalorder %s370, 0
          %p373 = pnand %p372, %p371
          %p374 = pneg %p373
          %s375 = sadd.s32 %s370, 2
          %s376 = scalar_select %p374, %s375, %s370
          %p377 = scmp.lt.s32.totalorder %s376, 1
          %s378 = scalar_select %p377, %s376, 1
          %s379 = smul.addr %s378, 4
          %s380 = scalar_lea.vmem %s3, %s379
          %s381 = sadd.s32 %s18, 4
          %p382 = scmp.lt.s32.totalorder %s381, 0
          %s383 = ssub.s32 0, %s381
          %s384 = scalar_select %p382, %s383, %s381
          %s385 = sand.u32 %s384, 1
          %s386 = ssub.s32 0, %s385
          %s387 = scalar_select %p382, %s386, %s385
          %p388 = scmp.ne.s32.totalorder %s387, 0
          %p389 = scmp.lt.s32.totalorder %s387, 0
          %p390 = pnand %p389, %p388
          %p391 = pneg %p390
          %s392 = sadd.s32 %s387, 2
          %s393 = scalar_select %p391, %s392, %s387
        $region100: #{shuffle_attention_pallas.1} parent=15 // pred_fallthru
          _
      $region16: #{shuffle_attention_pallas.1} parent=5 // pred_fallthru
        _
      %p394 = scmp.le.s32.totalorder 1, %s10
      %p395 = scmp.lt.s32.totalorder %s10, 5
      %p396 = pnand %p394, %p395
      %p397 = pneg %p396
      // Predicated region
      $region101: #{shuffle_attention_pallas.1} parent=5 // pred_check
        _
      $region102: #{shuffle_attention_pallas.1} parent=5 // pred_check_branch
        %399 = sbr.rel (%p396) target = $region104
      $region103: #{shuffle_attention_pallas.1} parent=5 // pred_region
        %s400 = ssub.s32 %s10, 1
        %s401 = sand.u32 %s37, 1
        %s402 = sand.u32 %s37, 1
        %s403 = smul.addr %s402, 16
        %s404 = scalar_lea.vmem [#allocation2], %s403
        // Predicated region
        $region105: #{shuffle_attention_pallas.1} parent=103 // pred_check
          %p405 = pneg %p50
        $region106: #{shuffle_attention_pallas.1} parent=103 // pred_check_branch
          %407 = sbr.rel (%p405) target = $region108
        $region107: #{shuffle_attention_pallas.1} parent=103 // pred_region
          _
        $region108: #{shuffle_attention_pallas.1} parent=103 // pred_fallthru
          _
        %s408 = sand.u32 %s67, 1
        %s409 = sand.u32 %s67, 1
        %s410 = smul.addr %s409, 16
        %s411 = scalar_lea.vmem [#allocation3], %s410
        // Predicated region
        $region109: #{shuffle_attention_pallas.1} parent=103 // pred_check
          %p412 = pneg %p80
        $region110: #{shuffle_attention_pallas.1} parent=103 // pred_check_branch
          %414 = sbr.rel (%p412) target = $region112
        $region111: #{shuffle_attention_pallas.1} parent=103 // pred_region
          _
        $region112: #{shuffle_attention_pallas.1} parent=103 // pred_fallthru
          _
        %s415 = sand.u32 %s37, 1
        %s416 = sand.u32 %s37, 1
        %s417 = smul.addr %s416, 16
        %s418 = scalar_lea.vmem [#allocation2], %s417
        %p419 = pneg %p50
        %p420 = pneg %p47
        %s421 = sand.u32 %s67, 1
        %s422 = sand.u32 %s67, 1
        %s423 = smul.addr %s422, 16
        %s424 = scalar_lea.vmem [#allocation3], %s423
        %p425 = pneg %p80
        %p426 = pneg %p77
        %p427 = scmp.lt.s32.totalorder %s20, 0
        %s428 = ssub.s32 0, %s20
        %s429 = scalar_select %p427, %s428, %s20
        %s430 = sand.u32 %s429, 1
        %s431 = ssub.s32 0, %s430
        %s432 = scalar_select %p427, %s431, %s430
        %p433 = scmp.ne.s32.totalorder %s432, 0
        %p434 = scmp.lt.s32.totalorder %s432, 0
        %p435 = pnand %p434, %p433
        %p436 = pneg %p435
        %s437 = sadd.s32 %s432, 2
        %s438 = scalar_select %p436, %s437, %s432
        %p439 = scmp.lt.s32.totalorder %s438, 1
        %s440 = scalar_select %p439, %s438, 1
        %s441 = smul.addr %s440, 4
        %s442 = scalar_lea.vmem %s2, %s441
        %p443 = pneg %p130
        %p444 = pneg %p127
        %s445 = sadd.s32 %s20, 4
        %p446 = scmp.lt.s32.totalorder %s445, 0
        %s447 = ssub.s32 0, %s445
        %s448 = scalar_select %p446, %s447, %s445
        %s449 = sand.u32 %s448, 1
        %s450 = ssub.s32 0, %s449
        %s451 = scalar_select %p446, %s450, %s449
        %p452 = scmp.ne.s32.totalorder %s451, 0
        %p453 = scmp.lt.s32.totalorder %s451, 0
        %p454 = pnand %p453, %p452
        %p455 = pneg %p454
        %s456 = sadd.s32 %s451, 2
        %s457 = scalar_select %p455, %s456, %s451
        %p458 = scmp.lt.s32.totalorder %s457, 1
        %s459 = scalar_select %p458, %s457, 1
        %s460 = smul.addr %s459, 4
        %s461 = scalar_lea.vmem %s3, %s460
        %p462 = pneg %p182
        %p463 = pneg %p179
        %p464 = pneg %p210
        %p465 = pneg %p207
        %s466 = sand.u32 %s197, 1
        %s467 = sand.u32 %s197, 1
        %s468 = smul.addr %s467, 32
        %s469 = scalar_lea.vmem [#allocation4], %s468
        %s470 = smul.u32 2, %s19
        %s471 = sadd.s32 %s20, 4
        %s472 = smul.u32 2, %s19
        %p473 = scmp.lt.s32.totalorder %s20, 0
        %s474 = ssub.s32 0, %s20
        %s475 = scalar_select %p473, %s474, %s20
        %s476 = sand.u32 %s475, 1
        %s477 = ssub.s32 0, %s476
        %s478 = scalar_select %p473, %s477, %s476
        %p479 = scmp.ne.s32.totalorder %s478, 0
        %p480 = scmp.lt.s32.totalorder %s478, 0
        %p481 = pnand %p480, %p479
        %p482 = pneg %p481
        %s483 = sadd.s32 %s478, 2
        %s484 = scalar_select %p482, %s483, %s478
        %p485 = scmp.lt.s32.totalorder %s484, 1
        %s486 = scalar_select %p485, %s484, 1
        %s487 = smul.addr %s486, 4
        %s488 = scalar_lea.vmem %s2, %s487
        %p489 = scmp.lt.s32.totalorder %s20, 0
        %s490 = ssub.s32 0, %s20
        %s491 = scalar_select %p489, %s490, %s20
        %s492 = sand.u32 %s491, 1
        %s493 = ssub.s32 0, %s492
        %s494 = scalar_select %p489, %s493, %s492
        %p495 = scmp.ne.s32.totalorder %s494, 0
        %p496 = scmp.lt.s32.totalorder %s494, 0
        %p497 = pnand %p496, %p495
        %p498 = pneg %p497
        %s499 = sadd.s32 %s494, 2
        %s500 = scalar_select %p498, %s499, %s494
        %s501 = sadd.s32 %s20, 4
        %p502 = scmp.lt.s32.totalorder %s501, 0
        %s503 = ssub.s32 0, %s501
        %s504 = scalar_select %p502, %s503, %s501
        %s505 = sand.u32 %s504, 1
        %s506 = ssub.s32 0, %s505
        %s507 = scalar_select %p502, %s506, %s505
        %p508 = scmp.ne.s32.totalorder %s507, 0
        %p509 = scmp.lt.s32.totalorder %s507, 0
        %p510 = pnand %p509, %p508
        %p511 = pneg %p510
        %s512 = sadd.s32 %s507, 2
        %s513 = scalar_select %p511, %s512, %s507
        %p514 = scmp.lt.s32.totalorder %s513, 1
        %s515 = scalar_select %p514, %s513, 1
        %s516 = smul.addr %s515, 4
        %s517 = scalar_lea.vmem %s3, %s516
        %s518 = sadd.s32 %s20, 4
        %p519 = scmp.lt.s32.totalorder %s518, 0
        %s520 = ssub.s32 0, %s518
        %s521 = scalar_select %p519, %s520, %s518
        %s522 = sand.u32 %s521, 1
        %s523 = ssub.s32 0, %s522
        %s524 = scalar_select %p519, %s523, %s522
        %p525 = scmp.ne.s32.totalorder %s524, 0
        %p526 = scmp.lt.s32.totalorder %s524, 0
        %p527 = pnand %p526, %p525
        %p528 = pneg %p527
        %s529 = sadd.s32 %s524, 2
        %s530 = scalar_select %p528, %s529, %s524
        %s531 = smul.u32 2, %s19
        %v532 = vld [vmem:[%s404] sm:$0xff]
        %v533 = vld [vmem:[%s404 + $0x8] sm:$0xff]
        %v534 = vld [vmem:[%s488] sm:$0xf]
        %v537 = vcombine.high %v532, %v532
        %v538 = vcombine.high %v533, %v533
        %vm541 = vcmask 1043456
        %v542 = vsel %vm541, %v532, 0.0
        %v543 = vsel %vm541, %v537, 0.0
        %v544 = vadd.f32 %v542, %v543
        %545 = vadd.xlane.f32.xlu0 %v544
        %v546 = vpop.xlane.xlu0 %545
        %v547 = vsel %vm541, %v533, 0.0
        %v548 = vsel %vm541, %v538, 0.0
        %v549 = vadd.f32 %v547, %v548
        %550 = vadd.xlane.f32.xlu0 %v549
        %v551 = vpop.xlane.xlu0 %550
        %v552 = vmul.f32 %v532, %v532
        %v553 = vmul.f32 %v533, %v533
        %v556 = vcombine.high %v552, %v552
        %v557 = vcombine.high %v553, %v553
        %v560 = vsel %vm541, %v552, 0.0
        %v561 = vsel %vm541, %v556, 0.0
        %v562 = vadd.f32 %v560, %v561
        %563 = vadd.xlane.f32.xlu0 %v562
        %v564 = vpop.xlane.xlu0 %563
        %v565 = vsel %vm541, %v553, 0.0
        %v566 = vsel %vm541, %v557, 0.0
        %v567 = vadd.f32 %v565, %v566
        %568 = vadd.xlane.f32.xlu0 %v567
        %v569 = vpop.xlane.xlu0 %568
        %v570 = vmul.f32 %v546, 0.00390625
        %v571 = vmul.f32 %v551, 0.00390625
        %v572 = vmul.f32 %v564, 0.00390625
        %v573 = vmul.f32 %v569, 0.00390625
        %v574 = vmul.f32 %v570, %v570
        %v575 = vmul.f32 %v571, %v571
        %v576 = vsub.f32 %v572, %v574
        %v577 = vsub.f32 %v573, %v575
        %v578 = vmax.f32 %v576, 0.0
        %v579 = vmax.f32 %v577, 0.0
        %v580 = vadd.f32 %v578, 1e-05
        %v581 = vadd.f32 %v579, 1e-05
        %v582 = vrsqrt.pop %v580
        %v583 = vrsqrt.pop %v581
        %v584 = vmul.f32 %v534, %v582
        %v585 = vmul.f32 %v534, %v583
        %588 = vrot.lane.b32.xlu0 %v584, 1
        %v589 = vpop.permute.xlu0 %588
        %590 = vrot.lane.b32.xlu0 %v585, 1
        %v591 = vpop.permute.xlu0 %590
        %v594 = vsub.f32 %v534, %v589
        %v595 = vsub.f32 %v534, %v591
        %v596 = vmul.f32 %v594, %v570
        %v597 = vmul.f32 %v595, %v571
        %599 = vrot.lane.b32.xlu0 %v534, 127
        %v600 = vpop.permute.xlu0 %599
        %v602 = vadd.f32 %v596, %v600
        %v603 = vadd.f32 %v597, %v600
        %604 = vset.pattern.permute.xlu0 0
        %605 = vperm.xlu0 %604, %v584
        %v606 = vpop.permute.xlu0 %605
        %607 = vset.pattern.permute.xlu0 0
        %608 = vperm.xlu0 %607, %v585
        %v609 = vpop.permute.xlu0 %608
        %v611 = vunpack.c.l.s4 839922192
        %v612 = vunpack.c.0.s8 %v611
        %v613 = vlaneseq
        %v614 = vshrl.u32 %v613, 7
        %v615 = vsub.s32 %v612, %v614
        %v616 = vrot.slane %v606, %v615
        %v618 = vunpack.c.l.s4 839922192
        %v619 = vunpack.c.0.s8 %v618
        %v620 = vlaneseq
        %v621 = vshrl.u32 %v620, 7
        %v622 = vsub.s32 %v619, %v621
        %v623 = vrot.slane %v609, %v622
        %v626 = vmul.f32 %v532, %v616
        %v627 = vmul.f32 %v533, %v623
        %629 = vset.pattern.permute.xlu0 1
        %630 = vperm.xlu0 %629, %v602
        %v631 = vpop.permute.xlu0 %630
        %633 = vset.pattern.permute.xlu0 1
        %634 = vperm.xlu0 %633, %v603
        %v635 = vpop.permute.xlu0 %634
        %v637 = vunpack.c.l.s4 839922192
        %v638 = vunpack.c.0.s8 %v637
        %v639 = vlaneseq
        %v640 = vshrl.u32 %v639, 7
        %v641 = vsub.s32 %v638, %v640
        %v642 = vrot.slane %v631, %v641
        %v644 = vunpack.c.l.s4 839922192
        %v645 = vunpack.c.0.s8 %v644
        %v646 = vlaneseq
        %v647 = vshrl.u32 %v646, 7
        %v648 = vsub.s32 %v645, %v647
        %v649 = vrot.slane %v635, %v648
        %v652 = vadd.f32 %v626, %v642
        %v653 = vadd.f32 %v627, %v649
        %v654 = vmul.f32 %v652, 0.5
        %v655 = vmul.f32 %v653, 0.5
        %v656 = vtanh.pop %v654
        %v657 = vtanh.pop %v655
        %v658 = vmul.f32 %v656, 0.5
        %v659 = vmul.f32 %v657, 0.5
        %v660 = vadd.f32 %v658, 0.5
        %v661 = vadd.f32 %v659, 0.5
        %v662 = vmul.f32 %v532, %v660
        %v663 = vmul.f32 %v533, %v661
        %v664 = vld [vmem:[%s411] sm:$0xff]
        %v665 = vld [vmem:[%s411 + $0x8] sm:$0xff]
        %v666 = vld [vmem:[%s517] sm:$0xf]
        %v669 = vcombine.high %v664, %v664
        %v670 = vcombine.high %v665, %v665
        %v673 = vsel %vm541, %v664, 0.0
        %v674 = vsel %vm541, %v669, 0.0
        %v675 = vadd.f32 %v673, %v674
        %676 = vadd.xlane.f32.xlu0 %v675
        %v677 = vpop.xlane.xlu0 %676
        %v678 = vsel %vm541, %v665, 0.0
        %v679 = vsel %vm541, %v670, 0.0
        %v680 = vadd.f32 %v678, %v679
        %681 = vadd.xlane.f32.xlu0 %v680
        %v682 = vpop.xlane.xlu0 %681
        %v683 = vmul.f32 %v664, %v664
        %v684 = vmul.f32 %v665, %v665
        %v687 = vcombine.high %v683, %v683
        %v688 = vcombine.high %v684, %v684
        %v691 = vsel %vm541, %v683, 0.0
        %v692 = vsel %vm541, %v687, 0.0
        %v693 = vadd.f32 %v691, %v692
        %694 = vadd.xlane.f32.xlu0 %v693
        %v695 = vpop.xlane.xlu0 %694
        %v696 = vsel %vm541, %v684, 0.0
        %v697 = vsel %vm541, %v688, 0.0
        %v698 = vadd.f32 %v696, %v697
        %699 = vadd.xlane.f32.xlu0 %v698
        %v700 = vpop.xlane.xlu0 %699
        %v701 = vmul.f32 %v677, 0.00390625
        %v702 = vmul.f32 %v682, 0.00390625
        %v703 = vmul.f32 %v695, 0.00390625
        %v704 = vmul.f32 %v700, 0.00390625
        %v705 = vmul.f32 %v701, %v701
        %v706 = vmul.f32 %v702, %v702
        %v707 = vsub.f32 %v703, %v705
        %v708 = vsub.f32 %v704, %v706
        %v709 = vmax.f32 %v707, 0.0
        %v710 = vmax.f32 %v708, 0.0
        %v711 = vadd.f32 %v709, 1e-05
        %v712 = vadd.f32 %v710, 1e-05
        %v713 = vrsqrt.pop %v711
        %v714 = vrsqrt.pop %v712
        %v715 = vmul.f32 %v666, %v713
        %v716 = vmul.f32 %v666, %v714
        %719 = vrot.lane.b32.xlu0 %v715, 1
        %v720 = vpop.permute.xlu0 %719
        %721 = vrot.lane.b32.xlu0 %v716, 1
        %v722 = vpop.permute.xlu0 %721
        %v725 = vsub.f32 %v666, %v720
        %v726 = vsub.f32 %v666, %v722
        %v727 = vmul.f32 %v725, %v701
        %v728 = vmul.f32 %v726, %v702
        %730 = vrot.lane.b32.xlu0 %v666, 127
        %v731 = vpop.permute.xlu0 %730
        %v733 = vadd.f32 %v727, %v731
        %v734 = vadd.f32 %v728, %v731
        %735 = vset.pattern.permute.xlu0 0
        %736 = vperm.xlu0 %735, %v715
        %v737 = vpop.permute.xlu0 %736
        %738 = vset.pattern.permute.xlu0 0
        %739 = vperm.xlu0 %738, %v716
        %v740 = vpop.permute.xlu0 %739
        %v742 = vunpack.c.l.s4 839922192
        %v743 = vunpack.c.0.s8 %v742
        %v744 = vlaneseq
        %v745 = vshrl.u32 %v744, 7
        %v746 = vsub.s32 %v743, %v745
        %v747 = vrot.slane %v737, %v746
        %v749 = vunpack.c.l.s4 839922192
        %v750 = vunpack.c.0.s8 %v749
        %v751 = vlaneseq
        %v752 = vshrl.u32 %v751, 7
        %v753 = vsub.s32 %v750, %v752
        %v754 = vrot.slane %v740, %v753
        %v757 = vmul.f32 %v664, %v747
        %v758 = vmul.f32 %v665, %v754
        %760 = vset.pattern.permute.xlu0 1
        %761 = vperm.xlu0 %760, %v733
        %v762 = vpop.permute.xlu0 %761
        %764 = vset.pattern.permute.xlu0 1
        %765 = vperm.xlu0 %764, %v734
        %v766 = vpop.permute.xlu0 %765
        %v768 = vunpack.c.l.s4 839922192
        %v769 = vunpack.c.0.s8 %v768
        %v770 = vlaneseq
        %v771 = vshrl.u32 %v770, 7
        %v772 = vsub.s32 %v769, %v771
        %v773 = vrot.slane %v762, %v772
        %v775 = vunpack.c.l.s4 839922192
        %v776 = vunpack.c.0.s8 %v775
        %v777 = vlaneseq
        %v778 = vshrl.u32 %v777, 7
        %v779 = vsub.s32 %v776, %v778
        %v780 = vrot.slane %v766, %v779
        %v783 = vadd.f32 %v757, %v773
        %v784 = vadd.f32 %v758, %v780
        %v785 = vmul.f32 %v783, 0.5
        %v786 = vmul.f32 %v784, 0.5
        %v787 = vtanh.pop %v785
        %v788 = vtanh.pop %v786
        %v789 = vmul.f32 %v787, 0.5
        %v790 = vmul.f32 %v788, 0.5
        %v791 = vadd.f32 %v789, 0.5
        %v792 = vadd.f32 %v790, 0.5
        %v793 = vmul.f32 %v664, %v791
        %v794 = vmul.f32 %v665, %v792
        %v797 = vcombine.high %v662, %v662
        %v798 = vcombine.high %v663, %v663
        %v801 = vcombine.high %v793, %v793
        %v802 = vcombine.high %v794, %v794
        %v803 = vcombine.low %v662, %v797
        %v804 = vcombine.low %v793, %v801
        %v805 = vcombine.low %v663, %v798
        %v806 = vcombine.low %v794, %v802
        %811 = vst [vmem:[%s469] sm:$0xff] %v803
        %812 = vst [vmem:[%s469 + $0x8] sm:$0xff] %v804
        %813 = vst [vmem:[%s469 + $0x10] sm:$0xff] %v805
        %814 = vst [vmem:[%s469 + $0x18] sm:$0xff] %v806
        %s815 = sand.u32 %s197, 1
        %s816 = sand.u32 %s197, 1
        %s817 = smul.addr %s816, 32
        %s818 = scalar_lea.vmem [#allocation4], %s817
        // Predicated region
        $region113: #{shuffle_attention_pallas.1} parent=103 // pred_check
          %p819 = pneg %p207
        $region114: #{shuffle_attention_pallas.1} parent=103 // pred_check_branch
          %821 = sbr.rel (%p819) target = $region116
        $region115: #{shuffle_attention_pallas.1} parent=103 // pred_region
          %s822 = smul.u32 2, %s19
          %s823 = smul.addr %s20, 4
          %s824 = smul.addr %s822, 16
          %s825 = sadd.s32 %s823, %s824
          %s826 = smul.addr %s825, 4
          %s827 = scalar_lea.vmem %s4, %s826
          // Predicated region
          $region117: #{shuffle_attention_pallas.1} parent=115 // pred_check
            _
          $region118: #{shuffle_attention_pallas.1} parent=115 // pred_check_branch
            %829 = sbr.rel (0) target = $region120
          $region119: #{shuffle_attention_pallas.1} parent=115 // pred_region
            // Predicated region
            $region121: #{shuffle_attention_pallas.1} parent=119 // pred_check
              _
            $region122: #{shuffle_attention_pallas.1} parent=119 // pred_check_branch
              %831 = sbr.rel (0) target = $region124
            $region123: #{shuffle_attention_pallas.1} parent=119 // pred_region
              loop: start=0, step=1, limit=1
              $region125: #{shuffle_attention_pallas.1} parent=123 // loop_pre_header
                _
              $region126: #{shuffle_attention_pallas.1} parent=123 // loop_header
                %s833 = sphi 0, %s837
                %p834 = scmp.ge.s32.totalorder %s833, 1
                %s838 = sphi %s818, %s818
                %s839 = sphi %s827, %s827
              $region127: #{shuffle_attention_pallas.1} parent=123 // loop_header_branch
                %836 = sbr.rel (%p834) target = $region131
              $region128: #{shuffle_attention_pallas.1} parent=123 // loop_body
                %v840 = vld [vmem:[%s838] sm:$0xff]
                %841 = vst [vmem:[%s839] sm:$0xff] %v840
                %v842 = vld [vmem:[%s838 + $0x8] sm:$0xff]
                %843 = vst [vmem:[%s839 + $0x8] sm:$0xff] %v842
                %v844 = vld [vmem:[%s838 + $0x10] sm:$0xff]
                %845 = vst [vmem:[%s839 + $0x40] sm:$0xff] %v844
                %v846 = vld [vmem:[%s838 + $0x18] sm:$0xff]
                %847 = vst [vmem:[%s839 + $0x48] sm:$0xff] %v846
              $region129: #{shuffle_attention_pallas.1} parent=123 // loop_footer
                %s837 = sadd.s32 1, %s833
              $region130: #{shuffle_attention_pallas.1} parent=123 // loop_footer_branch
                %832 = sbr.rel target = $region126
              $region131: #{shuffle_attention_pallas.1} parent=123 // loop_exit
                _
            $region124: #{shuffle_attention_pallas.1} parent=119 // pred_fallthru
              _
            // Predicated region
            $region132: #{shuffle_attention_pallas.1} parent=119 // pred_check
              _
            $region133: #{shuffle_attention_pallas.1} parent=119 // pred_check_branch
              %849 = sbr.rel target = $region135
            $region134: #{shuffle_attention_pallas.1} parent=119 // pred_region
              _
            $region135: #{shuffle_attention_pallas.1} parent=119 // pred_fallthru
              _
          $region120: #{shuffle_attention_pallas.1} parent=115 // pred_fallthru
            _
          %850 = vnop
        $region116: #{shuffle_attention_pallas.1} parent=103 // pred_fallthru
          _
      $region104: #{shuffle_attention_pallas.1} parent=5 // pred_fallthru
        _
      %p851 = scmp.le.s32.totalorder 2, %s10
      // Predicated region
      $region136: #{shuffle_attention_pallas.1} parent=5 // pred_check
        %p852 = pneg %p851
      $region137: #{shuffle_attention_pallas.1} parent=5 // pred_check_branch
        %854 = sbr.rel (%p852) target = $region139
      $region138: #{shuffle_attention_pallas.1} parent=5 // pred_region
        %s855 = ssub.s32 %s10, 2
        // Predicated region
        $region140: #{shuffle_attention_pallas.1} parent=138 // pred_check
          %p856 = pneg %p213
        $region141: #{shuffle_attention_pallas.1} parent=138 // pred_check_branch
          %858 = sbr.rel (%p856) target = $region143
        $region142: #{shuffle_attention_pallas.1} parent=138 // pred_region
          %s859 = sand.u32 %s198, 1
          %s860 = sand.u32 %s198, 1
          %s861 = smul.addr %s860, 32
          %s862 = scalar_lea.vmem [#allocation4], %s861
        $region143: #{shuffle_attention_pallas.1} parent=138 // pred_fallthru
          _
      $region139: #{shuffle_attention_pallas.1} parent=5 // pred_fallthru
        _
    $region6: #{shuffle_attention_pallas.1} parent=1 // loop_footer
      %s14 = sadd.s32 1, %s10
    $region7: #{shuffle_attention_pallas.1} parent=1 // loop_footer_branch
      %9 = sbr.rel target = $region3
    $region8: #{shuffle_attention_pallas.1} parent=1 // loop_exit
      _

</llo_original>
